<compile_context>
chip_gen: v6e
topology: v6e:2x2x1
jax: 0.10.0
libtpu: 0.0.40
codegen_flags: <defaults>
</compile_context>

<pallas_src>
import math
import functools

import jax
import jax.numpy as jnp
from jax.experimental import pallas as pl
from jax.experimental.pallas import tpu as pltpu


def _round_up(x: int, m: int) -> int:
    return ((x + m - 1) // m) * m


def _sublane_multiple(dtype) -> int:
    # Packed-sublane tile height: 8 rows (4-byte), 16 (2-byte), 32 (1-byte).
    return {4: 8, 2: 16, 1: 32}.get(jnp.dtype(dtype).itemsize, 8)


def _vmem_capacity_bytes() -> int:
    # Physical per-TensorCore VMEM; fall back to the smallest of v5e/v6e/v7x.
    try:
        info = pltpu.get_tpu_info()
        cap = int(getattr(info, "vmem_capacity_bytes", 0))
        if cap > 0:
            return cap
    except Exception:
        pass
    return 64 * 1024 * 1024


def _linear_ln_kernel(x_ref, w_ref, b_ref, g_ref, beta_ref, o_ref, *scratch,
                      use_layer_norm: bool, eps: float, inv_n: float,
                      num_k: int, acc_in_out: bool):
    """Produces one (tm, N_pad) output tile. Grid = (num_m, num_k); k = reduction."""

    def finalize(acc_f32):
        y = acc_f32 + b_ref[...].astype(jnp.float32)
        if use_layer_norm:
            # Padded lanes of y are exactly zero (weight columns and bias lanes
            # beyond the true N are zero-padded in make_linear_layer), so
            # unmasked sums over N_pad equal sums over the true N — no iota/mask.
            mean = jnp.sum(y, axis=-1, keepdims=True) * inv_n
            mean_sq = jnp.sum(y * y, axis=-1, keepdims=True) * inv_n
            var = mean_sq - mean * mean
            y = (y - mean) * jax.lax.rsqrt(var + eps)
            y = y * g_ref[...].astype(jnp.float32) + beta_ref[...].astype(jnp.float32)
        return y.astype(o_ref.dtype)

    if num_k == 1:
        # Weight fully VMEM-resident: one MXU pass, no accumulator, no branches.
        o_ref[...] = finalize(
            jnp.dot(x_ref[...], w_ref[...], preferred_element_type=jnp.float32))
        return

    acc_ref = o_ref if acc_in_out else scratch[0]
    k = pl.program_id(1)

    @pl.when(k == 0)
    def _():
        acc_ref[...] = jnp.zeros_like(acc_ref)

    # Native-dtype operands straight to the MXU; f32 accumulation.
    acc_ref[...] += jnp.dot(x_ref[...], w_ref[...],
                            preferred_element_type=jnp.float32)

    @pl.when(k == num_k - 1)
    def _():
        o_ref[...] = finalize(acc_ref[...].astype(jnp.float32))


def make_linear_layer(weight, bias=None, gamma=None, beta=None, *,
                      use_layer_norm=False, eps=1e-5, force_tk=None):
    """Builds forward(x) -> [LayerNorm](x @ weight.T + bias).

    weight: (out_features, in_features), exactly as nn.Linear stores it.
    bias / gamma / beta: (out_features,) or None.
    All parameter padding / transposition happens ONCE here (hoisted out of the
    per-call path); the padding is exact zeros, which the mask-free LayerNorm
    statistics in the kernel rely on.
    """
    N, K = weight.shape
    w_dtype = weight.dtype
    w_bytes = jnp.dtype(w_dtype).itemsize

    vmem_cap = _vmem_capacity_bytes()

    N_pad = _round_up(N, 128)            # lane-dense stores + full MXU columns
    K128 = _round_up(K, 128)

    # ---- choose the K tile ---------------------------------------------------
    # The (tk, N_pad) weight slab is double-buffered by the pipeline; keep
    # 2 * slab within ~35% of physical VMEM. If the *whole* weight fits that
    # budget, make it VMEM-resident (tk = K_pad, num_k == 1): it is then DMA'd
    # exactly once for the whole grid instead of once per M tile.
    slab_budget = int(vmem_cap * 0.35) // 2
    if force_tk is not None:
        tk = max(128, (int(force_tk) // 128) * 128)
    elif K128 * N_pad * w_bytes <= slab_budget:
        tk = K128
    else:
        tk = slab_budget // max(1, N_pad * w_bytes)
        tk = max(128, (tk // 128) * 128)
        if tk >= 256:
            tk = (tk // 256) * 256       # fill the 256-deep MXU pass on v6e/v7x
    tk = min(tk, K128)
    K_pad = _round_up(K, tk)
    num_k = K_pad // tk

    # Guard: without N tiling, extremely wide outputs cannot fit a minimal plan.
    if 2 * 128 * N_pad * w_bytes + 3 * 8 * N_pad * 4 > int(vmem_cap * 0.9):
        # TODO(synk): add an N grid axis with running LayerNorm statistics.
        raise ValueError("out_features too large for a single-N-tile plan")

    # ---- pad parameters once (exact zeros in all padded lanes) ---------------
    w_p = jnp.pad(weight.T, ((0, K_pad - K), (0, N_pad - N)))
    if bias is None:
        bias = jnp.zeros((N,), w_dtype)
    if gamma is None:
        gamma = jnp.ones((N,), w_dtype)
    if beta is None:
        beta = jnp.zeros((N,), w_dtype)
    b_p = jnp.pad(jnp.asarray(bias), (0, N_pad - N)).reshape(1, N_pad)
    g_p = jnp.pad(jnp.asarray(gamma), (0, N_pad - N)).reshape(1, N_pad)
    beta_p = jnp.pad(jnp.asarray(beta), (0, N_pad - N)).reshape(1, N_pad)
    const_bytes = 2 * (b_p.nbytes + g_p.nbytes + beta_p.nbytes)

    def forward(x):
        M, Kx = x.shape
        assert Kx == K, f"expected in_features={K}, got {Kx}"
        out_dtype = x.dtype
        x_bytes = jnp.dtype(x.dtype).itemsize
        o_bytes = jnp.dtype(out_dtype).itemsize

        # Accumulate directly into the output block (resident across the k axis)
        # when it is already f32; otherwise use a separate f32 VMEM scratch.
        acc_in_out = (num_k == 1) or (out_dtype == jnp.float32)
        separate_acc = (num_k > 1) and not acc_in_out

        # ---- choose the M tile from the remaining VMEM budget ----------------
        sub = _sublane_multiple(x.dtype)
        slab2 = 2 * tk * N_pad * w_bytes
        per_row = (2 * tk * x_bytes + 2 * N_pad * o_bytes
                   + (N_pad * 4 if separate_acc else 0))
        remaining = int(vmem_cap * 0.75) - slab2 - const_bytes
        tm = remaining // max(1, per_row)
        tm = min(512, (tm // sub) * sub)        # weight reuse ~ 2*tm/w_bytes FLOP/byte
        tm = max(sub, min(tm, _round_up(M, sub)))
        M_pad = _round_up(M, tm)
        num_m = M_pad // tm

        # Fast path: skip x padding / output slicing when already aligned.
        if M_pad != M or K_pad != K:
            x_p = jnp.pad(x, ((0, M_pad - M), (0, K_pad - K)))
        else:
            x_p = x

        # Explicit scoped-VMEM limit for this plan (+ headroom), capped at the
        # physical capacity, so the generation defaults never bind.
        plan_bytes = (2 * tm * tk * x_bytes + slab2 + 2 * tm * N_pad * o_bytes
                      + (tm * N_pad * 4 if separate_acc else 0) + const_bytes)
        vmem_limit = min(max(int(plan_bytes * 1.3) + (4 << 20), 32 << 20),
                         vmem_cap, 128 << 20)

        # Weight is re-streamed per M tile only when its block index changes
        # with k (num_k > 1); with num_k == 1 it is fetched exactly once.
        weight_reads = num_m if num_k > 1 else 1
        cost = pl.CostEstimate(
            flops=2 * M_pad * K_pad * N_pad,
            transcendentals=M_pad if use_layer_norm else 0,
            bytes_accessed=(M_pad * K_pad * x_bytes
                            + weight_reads * K_pad * N_pad * w_bytes
                            + b_p.nbytes + g_p.nbytes + beta_p.nbytes
                            + M_pad * N_pad * o_bytes),
        )

        kernel = functools.partial(
            _linear_ln_kernel, use_layer_norm=use_layer_norm, eps=float(eps),
            inv_n=1.0 / float(N), num_k=num_k, acc_in_out=acc_in_out)

        scratch_shapes = ([pltpu.VMEM((tm, N_pad), jnp.float32)]
                          if separate_acc else [])

        out_p = pl.pallas_call(
            kernel,
            out_shape=jax.ShapeDtypeStruct((M_pad, N_pad), out_dtype),
            grid_spec=pltpu.PrefetchScalarGridSpec(
                num_scalar_prefetch=0,
                grid=(num_m, num_k),
                in_specs=[
                    pl.BlockSpec((tm, tk), lambda i, k: (i, k)),      # x tile
                    pl.BlockSpec((tk, N_pad), lambda i, k: (k, 0)),   # weight slab
                    pl.BlockSpec((1, N_pad), lambda i, k: (0, 0)),    # bias
                    pl.BlockSpec((1, N_pad), lambda i, k: (0, 0)),    # LN gamma
                    pl.BlockSpec((1, N_pad), lambda i, k: (0, 0)),    # LN beta
                ],
                out_specs=pl.BlockSpec((tm, N_pad), lambda i, k: (i, 0)),
                scratch_shapes=scratch_shapes,
            ),
            compiler_params=pltpu.CompilerParams(
                # M tiles are independent -> "parallel" (megacore-shardable);
                # k is the contraction axis -> "arbitrary".
                dimension_semantics=("parallel", "arbitrary"),
                vmem_limit_bytes=vmem_limit),
            cost_estimate=cost,
        )(x_p, w_p, b_p, g_p, beta_p)

        if M_pad != M or N_pad != N:
            return out_p[:M, :N]
        return out_p

    return forward


def init_params(key, in_features, out_features, init_type="kaiming_uniform"):
    """Deterministic parameter init mirroring the PyTorch module's __init__."""
    if init_type == "kaiming_uniform":
        # gain(relu) = sqrt(2); bound = gain * sqrt(3 / fan_in)
        bound = math.sqrt(2.0) * math.sqrt(3.0 / in_features)
        weight = jax.random.uniform(key, (out_features, in_features),
                                    jnp.float32, -bound, bound)
    elif init_type == "kaiming_normal":
        std = math.sqrt(2.0 / in_features)
        weight = std * jax.random.normal(key, (out_features, in_features), jnp.float32)
    else:
        raise ValueError(f"Unsupported init_type for this script: {init_type}")
    bias = jnp.zeros((out_features,), jnp.float32)     # nn.init.zeros_
    gamma = jnp.ones((out_features,), jnp.float32)     # LayerNorm weight
    beta = jnp.zeros((out_features,), jnp.float32)     # LayerNorm bias
    return weight, bias, gamma, beta


def _reference(x, weight, bias, gamma, beta, use_layer_norm, eps):
    y = x @ weight.T + bias
    if use_layer_norm:
        mean = y.mean(axis=-1, keepdims=True)
        var = ((y - mean) ** 2).mean(axis=-1, keepdims=True)
        y = (y - mean) / jnp.sqrt(var + eps) * gamma + beta
    return y


if __name__ == "__main__":
    key = jax.random.PRNGKey(0)
    kx1, kp1, kx2, kp2 = jax.random.split(key, 4)

    # --- Case 1: Linear + LayerNorm (dropout is an eval-mode no-op). ----------
    # The whole padded weight fits VMEM -> single-K fast path, weight DMA'd once.
    batch, in_features, out_features = 16, 64, 32
    x = jax.random.normal(kx1, (batch, in_features), jnp.float32)
    weight, bias, gamma, beta = init_params(kp1, in_features, out_features)
    fwd = make_linear_layer(weight, bias, gamma, beta,
                            use_layer_norm=True, eps=1e-5)
    out = jax.block_until_ready(fwd(x))
    ref = _reference(x, weight, bias, gamma, beta, True, 1e-5)
    assert out.shape == (batch, out_features)
    assert jnp.allclose(out, ref, atol=1e-3, rtol=1e-3), "case 1 mismatch"

    # --- Case 2: force the multi-K accumulation path (acc lives in o_ref). ----
    batch2, in2, out2 = 16, 256, 32
    x2 = jax.random.normal(kx2, (batch2, in2), jnp.float32)
    w2, b2, _, _ = init_params(kp2, in2, out2)
    fwd2 = make_linear_layer(w2, b2, use_layer_norm=False, force_tk=128)
    o2 = jax.block_until_ready(fwd2(x2))
    ref2 = _reference(x2, w2, b2, None, None, False, 1e-5)
    assert o2.shape == (batch2, out2)
    assert jnp.allclose(o2, ref2, atol=1e-3, rtol=1e-3), "case 2 mismatch"

    print("KERNEL_OK")
</pallas_src>

<mosaic_0001>
module attributes {stable_mosaic.version = 11 : i64} {
  func.func @_linear_ln_kernel(%arg0: i32, %arg1: i32, %arg2: memref<16x128xf32, #tpu.memory_space<vmem>>, %arg3: memref<128x128xf32, #tpu.memory_space<vmem>>, %arg4: memref<1x128xf32, #tpu.memory_space<vmem>>, %arg5: memref<1x128xf32, #tpu.memory_space<vmem>>, %arg6: memref<1x128xf32, #tpu.memory_space<vmem>>, %arg7: memref<16x128xf32, #tpu.memory_space<vmem>>) attributes {dimension_semantics = [#tpu.dimension_semantics<parallel>, #tpu.dimension_semantics<arbitrary>], iteration_bounds = array<i64: 1, 1>, scalar_prefetch = 0 : i64, scratch_operands = 0 : i64, tpu.core_type = #tpu.core_type<tc>, window_params = [{transform_indices = @transform_0, window_bounds = array<i64: 16, 128>}, {transform_indices = @transform_1, window_bounds = array<i64: 128, 128>}, {pipeline_mode = #tpu.pipeline_mode<synchronous>, transform_indices = @transform_2, window_bounds = array<i64: 1, 128>}, {pipeline_mode = #tpu.pipeline_mode<synchronous>, transform_indices = @transform_3, window_bounds = array<i64: 1, 128>}, {pipeline_mode = #tpu.pipeline_mode<synchronous>, transform_indices = @transform_4, window_bounds = array<i64: 1, 128>}, {transform_indices = @transform_5, window_bounds = array<i64: 16, 128>}]} {
    %c0 = arith.constant 0 : index
    %c0_0 = arith.constant 0 : index
    %0 = vector.load %arg2[%c0, %c0_0] : memref<16x128xf32, #tpu.memory_space<vmem>>, vector<16x128xf32>
    %c0_1 = arith.constant 0 : index
    %c0_2 = arith.constant 0 : index
    %1 = vector.load %arg3[%c0_1, %c0_2] : memref<128x128xf32, #tpu.memory_space<vmem>>, vector<128x128xf32>
    %cst = arith.constant dense<0.000000e+00> : vector<16x128xf32>
    %2 = tpu.matmul %0, %1, %cst {dimension_numbers = #tpu.dot_dimension_numbers<[1], [0], [0], [1], [0, 0, 1, 1], [], []>} : vector<16x128xf32>, vector<128x128xf32>, vector<16x128xf32> -> vector<16x128xf32>
    %c0_3 = arith.constant 0 : index
    %c0_4 = arith.constant 0 : index
    %3 = vector.load %arg4[%c0_3, %c0_4] : memref<1x128xf32, #tpu.memory_space<vmem>>, vector<1x128xf32>
    %4 = vector.broadcast %3 : vector<1x128xf32> to vector<16x128xf32>
    %5 = arith.addf %2, %4 : vector<16x128xf32>
    %cst_5 = arith.constant dense<0.000000e+00> : vector<16xf32>
    %6 = vector.multi_reduction <add>, %5, %cst_5 [1] : vector<16x128xf32> to vector<16xf32>
    %7 = vector.shape_cast %6 : vector<16xf32> to vector<16x1xf32>
    %cst_6 = arith.constant 3.125000e-02 : f32
    %8 = vector.broadcast %cst_6 : f32 to vector<16x1xf32>
    %9 = arith.mulf %7, %8 : vector<16x1xf32>
    %10 = arith.mulf %5, %5 : vector<16x128xf32>
    %cst_7 = arith.constant dense<0.000000e+00> : vector<16xf32>
    %11 = vector.multi_reduction <add>, %10, %cst_7 [1] : vector<16x128xf32> to vector<16xf32>
    %12 = vector.shape_cast %11 : vector<16xf32> to vector<16x1xf32>
    %cst_8 = arith.constant 3.125000e-02 : f32
    %13 = vector.broadcast %cst_8 : f32 to vector<16x1xf32>
    %14 = arith.mulf %12, %13 : vector<16x1xf32>
    %15 = arith.mulf %9, %9 : vector<16x1xf32>
    %16 = arith.subf %14, %15 : vector<16x1xf32>
    %17 = vector.broadcast %9 : vector<16x1xf32> to vector<16x128xf32>
    %18 = arith.subf %5, %17 : vector<16x128xf32>
    %cst_9 = arith.constant 9.99999974E-6 : f32
    %19 = vector.broadcast %cst_9 : f32 to vector<16x1xf32>
    %20 = arith.addf %16, %19 : vector<16x1xf32>
    %21 = math.rsqrt %20 : vector<16x1xf32>
    %22 = vector.broadcast %21 : vector<16x1xf32> to vector<16x128xf32>
    %23 = arith.mulf %18, %22 : vector<16x128xf32>
    %c0_10 = arith.constant 0 : index
    %c0_11 = arith.constant 0 : index
    %24 = vector.load %arg5[%c0_10, %c0_11] : memref<1x128xf32, #tpu.memory_space<vmem>>, vector<1x128xf32>
    %25 = vector.broadcast %24 : vector<1x128xf32> to vector<16x128xf32>
    %26 = arith.mulf %23, %25 : vector<16x128xf32>
    %c0_12 = arith.constant 0 : index
    %c0_13 = arith.constant 0 : index
    %27 = vector.load %arg6[%c0_12, %c0_13] : memref<1x128xf32, #tpu.memory_space<vmem>>, vector<1x128xf32>
    %28 = vector.broadcast %27 : vector<1x128xf32> to vector<16x128xf32>
    %29 = arith.addf %26, %28 : vector<16x128xf32>
    %c0_14 = arith.constant 0 : index
    %c0_15 = arith.constant 0 : index
    %30 = vector.load %arg7[%c0_14, %c0_15] : memref<16x128xf32, #tpu.memory_space<vmem>>, vector<16x128xf32>
    tpu.vector_store %arg7[%c0_14, %c0_15], %29 {strides = array<i32>} : memref<16x128xf32, #tpu.memory_space<vmem>>, vector<16x128xf32>,
    return
  }
  func.func @transform_0(%arg0: i32, %arg1: i32) -> (i32, i32) {
    %c0_i32 = arith.constant 0 : i32
    return %arg0, %arg1 : i32, i32
  }
  func.func @transform_1(%arg0: i32, %arg1: i32) -> (i32, i32) {
    %c0_i32 = arith.constant 0 : i32
    %c0_i32_0 = arith.constant 0 : i32
    return %arg1, %c0_i32 : i32, i32
  }
  func.func @transform_2(%arg0: i32, %arg1: i32) -> (i32, i32) {
    %c0_i32 = arith.constant 0 : i32
    %c0_i32_0 = arith.constant 0 : i32
    %c0_i32_1 = arith.constant 0 : i32
    return %c0_i32, %c0_i32_0 : i32, i32
  }
  func.func @transform_3(%arg0: i32, %arg1: i32) -> (i32, i32) {
    %c0_i32 = arith.constant 0 : i32
    %c0_i32_0 = arith.constant 0 : i32
    %c0_i32_1 = arith.constant 0 : i32
    return %c0_i32, %c0_i32_0 : i32, i32
  }
  func.func @transform_4(%arg0: i32, %arg1: i32) -> (i32, i32) {
    %c0_i32 = arith.constant 0 : i32
    %c0_i32_0 = arith.constant 0 : i32
    %c0_i32_1 = arith.constant 0 : i32
    return %c0_i32, %c0_i32_0 : i32, i32
  }
  func.func @transform_5(%arg0: i32, %arg1: i32) -> (i32, i32) {
    %c0_i32 = arith.constant 0 : i32
    %c0_i32_0 = arith.constant 0 : i32
    return %arg0, %c0_i32 : i32, i32
  }
}

</mosaic_0001>

<llo_original>
// kernel: tpu_custom_call.1
$region0: #{tpu_custom_call.1}
  #allocation0 [shape = 'u32[]', space=smem, size = 0x4, offset = 0x4, fixed_abs, tag = 'smem constant byte address 0x4 - core index']
  #allocation1 [shape = 'u32[144,128]{1,0:T(1,128)}', space=vmem, size = 0x12000, scoped, tag = 'internal scratch']
  %s0 = inlined_call_operand.hbm [shape: f32[16,128], index: 0, kind: input, shape index: {}]
  %s1 = inlined_call_operand.hbm [shape: f32[128,128], index: 1, kind: input, shape index: {}]
  %s2 = inlined_call_operand.vmem [shape: f32[1,128], index: 2, kind: input, shape index: {}]
  %s3 = inlined_call_operand.vmem [shape: f32[1,128], index: 3, kind: input, shape index: {}]
  %s4 = inlined_call_operand.vmem [shape: f32[1,128], index: 4, kind: input, shape index: {}]
  %s5 = inlined_call_operand.hbm [shape: f32[16,128], index: 5, kind: output, shape index: {}]
  %s6 = sld [smem:[#allocation0]]
  $region38: #{tpu_custom_call.1} parent=0
    _
  %s8 = ssub.s32 1, %s6
  %s9 = scalar_select 0, %s8, %s6
  $region1: #{tpu_custom_call.1} parent=0
    #allocation2 [shape = 'u8[8192]{0}', space=vmem, size = 0x2000, scoped, tag = 'input window, operand 0, single buffered']
    #allocation3 [shape = 's32[1]{0}', space=sflag, size = 0x4, scoped, tag = 'scoped memory for tpu_custom_call.1']
    #allocation4 [shape = 's32[1]{0}', space=sflag, size = 0x4, scoped, tag = 'scoped memory for tpu_custom_call.1']
    #allocation5 [shape = 'u8[65536]{0}', space=vmem, size = 0x10000, scoped, tag = 'input window, operand 1, single buffered']
    #allocation6 [shape = 's32[1]{0}', space=sflag, size = 0x4, scoped, tag = 'scoped memory for tpu_custom_call.1']
    #allocation7 [shape = 'u8[8192]{0}', space=vmem, size = 0x2000, scoped, tag = 'output window, operand 0, single buffered']
    %10 = vsyncpa [#allocation3], 0
    %11 = vsyncpa [#allocation6], 0
    %12 = vsyncpa [#allocation4], 0
    // Predicated region
    $region2: #{tpu_custom_call.1} parent=1 // pred_check
      _
    $region3: #{tpu_custom_call.1} parent=1 // pred_check_branch
      %14 = sbr.rel (0) target = $region5
    $region4: #{tpu_custom_call.1} parent=1 // pred_region
      %s16 = ssub.s32 256, 256
      %17 = vsyncadd [#allocation3], %s16
      %s18 = sshll.u32 [#allocation2], 4
      %s19 = int_to_ptr.vmem [resolvable:$true] %s18
      %24 = dma.hbm_to_vmem [thread:$0]  %s0, 256, %s19, [#allocation3], 128, 128, 8
    $region5: #{tpu_custom_call.1} parent=1 // pred_fallthru
      _
    // Predicated region
    $region6: #{tpu_custom_call.1} parent=1 // pred_check
      _
    $region7: #{tpu_custom_call.1} parent=1 // pred_check_branch
      %26 = sbr.rel (0) target = $region9
    $region8: #{tpu_custom_call.1} parent=1 // pred_region
      %s28 = ssub.s32 2048, 2048
      %29 = vsyncadd [#allocation6], %s28
      %s30 = sshll.u32 [#allocation5], 4
      %s31 = int_to_ptr.vmem [resolvable:$true] %s30
      %36 = dma.hbm_to_vmem [thread:$0]  %s1, 2048, %s31, [#allocation6], 128, 128, 8
    $region9: #{tpu_custom_call.1} parent=1 // pred_fallthru
      _
    // Predicated region
    $region10: #{tpu_custom_call.1} parent=1 // pred_check
      _
    $region11: #{tpu_custom_call.1} parent=1 // pred_check_branch
      %38 = sbr.rel (0) target = $region13
    $region12: #{tpu_custom_call.1} parent=1 // pred_region
      _
    $region13: #{tpu_custom_call.1} parent=1 // pred_fallthru
      _
    // Predicated region
    $region14: #{tpu_custom_call.1} parent=1 // pred_check
      _
    $region15: #{tpu_custom_call.1} parent=1 // pred_check_branch
      %40 = sbr.rel (0) target = $region17
    $region16: #{tpu_custom_call.1} parent=1 // pred_region
      _
    $region17: #{tpu_custom_call.1} parent=1 // pred_fallthru
      _
    // Predicated region
    $region18: #{tpu_custom_call.1} parent=1 // pred_check
      _
    $region19: #{tpu_custom_call.1} parent=1 // pred_check_branch
      %42 = sbr.rel (0) target = $region21
    $region20: #{tpu_custom_call.1} parent=1 // pred_region
      _
    $region21: #{tpu_custom_call.1} parent=1 // pred_fallthru
      _
    // Predicated region
    $region22: #{tpu_custom_call.1} parent=1 // pred_check
      _
    $region23: #{tpu_custom_call.1} parent=1 // pred_check_branch
      %44 = sbr.rel (0) target = $region25
    $region24: #{tpu_custom_call.1} parent=1 // pred_region
      %45 = dma.done [#allocation3], 256
    $region25: #{tpu_custom_call.1} parent=1 // pred_fallthru
      _
    // Predicated region
    $region26: #{tpu_custom_call.1} parent=1 // pred_check
      _
    $region27: #{tpu_custom_call.1} parent=1 // pred_check_branch
      %47 = sbr.rel (0) target = $region29
    $region28: #{tpu_custom_call.1} parent=1 // pred_region
      %48 = dma.done [#allocation6], 2048
    $region29: #{tpu_custom_call.1} parent=1 // pred_fallthru
      _
    %v49 = vld [vmem:[#allocation2] sm:$0xff]
    %v50 = vld [vmem:[#allocation2 + $0x8] sm:$0xff]
    %v51 = vld [vmem:[#allocation5] sm:$0xff]
    %v52 = vld [vmem:[#allocation5 + $0x8] sm:$0xff]
    %v53 = vld [vmem:[#allocation5 + $0x10] sm:$0xff]
    %v54 = vld [vmem:[#allocation5 + $0x18] sm:$0xff]
    %v55 = vld [vmem:[#allocation5 + $0x20] sm:$0xff]
    %v56 = vld [vmem:[#allocation5 + $0x28] sm:$0xff]
    %v57 = vld [vmem:[#allocation5 + $0x30] sm:$0xff]
    %v58 = vld [vmem:[#allocation5 + $0x38] sm:$0xff]
    %v59 = vld [vmem:[#allocation5 + $0x40] sm:$0xff]
    %v60 = vld [vmem:[#allocation5 + $0x48] sm:$0xff]
    %v61 = vld [vmem:[#allocation5 + $0x50] sm:$0xff]
    %v62 = vld [vmem:[#allocation5 + $0x58] sm:$0xff]
    %v63 = vld [vmem:[#allocation5 + $0x60] sm:$0xff]
    %v64 = vld [vmem:[#allocation5 + $0x68] sm:$0xff]
    %v65 = vld [vmem:[#allocation5 + $0x70] sm:$0xff]
    %v66 = vld [vmem:[#allocation5 + $0x78] sm:$0xff]
    %v67 = vld [vmem:[%s2] sm:$0x1]
    %v69 = vlaneseq
    %v70 = vshrl.u32 %v69, 7
    %v71 = vsub.s32 0, %v70
    %v72 = vrot.slane %v67, %v71
    %74 = vmatprep.subr.mxu0 0.0
    %75 = vmatpush1.msra.mxu0 %v66
    %76 = vmatprep.subr.mxu0 0.0
    %77 = vmatpush1.msra.mxu0 %v65
    %78 = vmatprep.subr.mxu0 0.0
    %79 = vmatpush1.msra.mxu0 %v64
    %80 = vmatprep.subr.mxu0 0.0
    %81 = vmatpush1.msra.mxu0 %v63
    %82 = vmatprep.subr.mxu0 0.0
    %83 = vmatpush1.msra.mxu0 %v62
    %84 = vmatprep.subr.mxu0 0.0
    %85 = vmatpush1.msra.mxu0 %v61
    %86 = vmatprep.subr.mxu0 0.0
    %87 = vmatpush1.msra.mxu0 %v60
    %88 = vmatprep.subr.mxu0 0.0
    %89 = vmatpush1.msra.mxu0 %v59
    %90 = vmatprep.subr.mxu0 0.0
    %91 = vmatpush1.msra.mxu0 %v58
    %92 = vmatprep.subr.mxu0 0.0
    %93 = vmatpush1.msra.mxu0 %v57
    %94 = vmatprep.subr.mxu0 0.0
    %95 = vmatpush1.msra.mxu0 %v56
    %96 = vmatprep.subr.mxu0 0.0
    %97 = vmatpush1.msra.mxu0 %v55
    %98 = vmatprep.subr.mxu0 0.0
    %99 = vmatpush1.msra.mxu0 %v54
    %100 = vmatprep.subr.mxu0 0.0
    %101 = vmatpush1.msra.mxu0 %v53
    %102 = vmatprep.subr.mxu0 0.0
    %103 = vmatpush1.msra.mxu0 %v52
    %104 = vmatprep.subr.mxu0 0.0
    %105 = vmatpush1.msra.mxu0 %v51
    %106 = vmatprep.subr.mxu0 0.0
    %107 = vmatpush2.msra.mxu0 0.0
    %108 = vmatprep.subr.mxu0 0.0
    %109 = vmatpush2.msra.mxu0 0.0
    %110 = vmatprep.subr.mxu0 0.0
    %111 = vmatpush2.msra.mxu0 0.0
    %112 = vmatprep.subr.mxu0 0.0
    %113 = vmatpush2.msra.mxu0 0.0
    %114 = vmatprep.subr.mxu0 0.0
    %115 = vmatpush2.msra.mxu0 0.0
    %116 = vmatprep.subr.mxu0 0.0
    %117 = vmatpush2.msra.mxu0 0.0
    %118 = vmatprep.subr.mxu0 0.0
    %119 = vmatpush2.msra.mxu0 0.0
    %120 = vmatprep.subr.mxu0 0.0
    %121 = vmatpush2.msra.mxu0 0.0
    %122 = vmatprep.subr.mxu0 0.0
    %123 = vmatpush2.msra.mxu0 0.0
    %124 = vmatprep.subr.mxu0 0.0
    %125 = vmatpush2.msra.mxu0 0.0
    %126 = vmatprep.subr.mxu0 0.0
    %127 = vmatpush2.msra.mxu0 0.0
    %128 = vmatprep.subr.mxu0 0.0
    %129 = vmatpush2.msra.mxu0 0.0
    %130 = vmatprep.subr.mxu0 0.0
    %131 = vmatpush2.msra.mxu0 0.0
    %132 = vmatprep.subr.mxu0 0.0
    %133 = vmatpush2.msra.mxu0 0.0
    %134 = vmatprep.subr.mxu0 0.0
    %135 = vmatpush2.msra.mxu0 0.0
    %136 = vmatprep.subr.mxu0 0.0
    %137 = vmatpush2.msra.mxu0 0.0
    %138 = vmatprep.mubr.f32.mxu0 0.0
    %139 = vmatmul.mubr.f32.gmra.mxu0 %v49
    %v140 = vpop.f32.mrf.mxu0
    %v141 = vadd.f32 %v72, %v140
    %v142 = vpop.f32.mrf.mxu0
    %143 = vmatprep.mubr.f32.mxu0 0.0
    %144 = vmatmul.mubr.f32.gmra.mxu0 %v50
    %v145 = vpop.f32.mrf.mxu0
    %v146 = vadd.f32 %v72, %v145
    %v147 = vpop.f32.mrf.mxu0
    %148 = vdwg.mxu0
    %149 = vadd.xlane.f32.xlu0 %v141
    %v150 = vpop.xlane.xlu0 %149
    %151 = vadd.xlane.f32.xlu0 %v146
    %v152 = vpop.xlane.xlu0 %151
    %v153 = vmul.f32 %v150, 0.03125
    %v154 = vmul.f32 %v152, 0.03125
    %v155 = vmul.f32 %v141, %v141
    %v156 = vmul.f32 %v146, %v146
    %157 = vadd.xlane.f32.xlu0 %v155
    %v158 = vpop.xlane.xlu0 %157
    %159 = vadd.xlane.f32.xlu0 %v156
    %v160 = vpop.xlane.xlu0 %159
    %v161 = vmul.f32 %v158, 0.03125
    %v162 = vmul.f32 %v160, 0.03125
    %v163 = vmul.f32 %v153, %v153
    %v164 = vmul.f32 %v154, %v154
    %v165 = vsub.f32 %v161, %v163
    %v166 = vsub.f32 %v162, %v164
    %v167 = vsub.f32 %v141, %v153
    %v168 = vsub.f32 %v146, %v154
    %v169 = vadd.f32 %v165, 1e-05
    %v170 = vadd.f32 %v166, 1e-05
    %v171 = vrsqrt.pop %v169
    %v172 = vrsqrt.pop %v170
    %v173 = vmul.f32 %v167, %v171
    %v174 = vmul.f32 %v168, %v172
    %v175 = vld [vmem:[%s3] sm:$0x1]
    %v177 = vlaneseq
    %v178 = vshrl.u32 %v177, 7
    %v179 = vsub.s32 0, %v178
    %v180 = vrot.slane %v175, %v179
    %v182 = vmul.f32 %v173, %v180
    %v183 = vmul.f32 %v174, %v180
    %v184 = vld [vmem:[%s4] sm:$0x1]
    %v186 = vlaneseq
    %v187 = vshrl.u32 %v186, 7
    %v188 = vsub.s32 0, %v187
    %v189 = vrot.slane %v184, %v188
    %v191 = vadd.f32 %v182, %v189
    %v192 = vadd.f32 %v183, %v189
    %193 = vst [vmem:[#allocation7] sm:$0xff] %v191
    %194 = vst [vmem:[#allocation7 + $0x8] sm:$0xff] %v192
    // Predicated region
    $region30: #{tpu_custom_call.1} parent=1 // pred_check
      _
    $region31: #{tpu_custom_call.1} parent=1 // pred_check_branch
      %196 = sbr.rel (0) target = $region33
    $region32: #{tpu_custom_call.1} parent=1 // pred_region
      %s198 = ssub.s32 256, 256
      %199 = vsyncadd [#allocation4], %s198
      %s200 = sshll.u32 [#allocation7], 4
      %s201 = int_to_ptr.vmem [resolvable:$true] %s200
      %206 = dma.vmem_to_hbm [thread:$0]  %s201, 256, %s5, [#allocation4], 128, 128, 8
    $region33: #{tpu_custom_call.1} parent=1 // pred_fallthru
      _
    // Predicated region
    $region34: #{tpu_custom_call.1} parent=1 // pred_check
      _
    $region35: #{tpu_custom_call.1} parent=1 // pred_check_branch
      %208 = sbr.rel (0) target = $region37
    $region36: #{tpu_custom_call.1} parent=1 // pred_region
      %209 = dma.done [#allocation4], 256
    $region37: #{tpu_custom_call.1} parent=1 // pred_fallthru
      _
    %210 = vsyncpa [#allocation3], 1
    %211 = vsyncpa [#allocation6], 1
    %212 = vsyncpa [#allocation4], 1

</llo_original>
